<compile_context>
chip_gen: v7x
topology: tpu7x:2x2x1
jax: 0.10.0
libtpu: 0.0.40
codegen_flags: <defaults>
</compile_context>

<pallas_src>
import functools

import jax
import jax.numpy as jnp
from jax.experimental import pallas as pl
from jax.experimental.pallas import tpu as pltpu


def _mlp_forward(x, w1, b1, w2, b2):
    """Fused MLP forward matching PyTorch nn.Linear semantics.

    x : (B, in_fea)          with in_fea == 1
    w1: (n_hidden, in_fea)   hidden.weight    b1: (n_hidden,) hidden.bias
    w2: (out_fea, n_hidden)  out.weight       b2: (out_fea,)  out.bias
    returns (B, out_fea)     with out_fea == 1
    """
    B, in_fea = x.shape
    H = w1.shape[0]
    out_fea = w2.shape[0]
    # Kernel is specialized to the module's 1 -> H -> 1 regression shapes.
    assert in_fea == 1 and out_fea == 1

    # --- Re-layout (cheap, fused under jit): batch on the lane (last) axis,
    # all parameters packed into a single (4H, 1) buffer:
    #   rows [0:H)     w1        (H, 1)
    #   rows [H:2H)    b1        (H, 1)
    #   rows [2H:3H)   w2^T      (H, 1)
    #   row  [3H]      b2        (1, 1)   (rest of the block is zero padding)
    x_t = x.reshape(B, in_fea).T                                   # (1, B)
    params = jnp.concatenate(
        [
            w1.reshape(H, 1),
            b1.reshape(H, 1),
            w2.reshape(out_fea, H).T.reshape(H, 1),
            jnp.pad(b2.reshape(1, 1), ((0, H - 1), (0, 0))),
        ],
        axis=0,
    )                                                              # (4H, 1)

    def kernel(x_ref, p_ref, o_ref):
        xv = x_ref[...]                                            # (1, B)
        # Static, 8-aligned sublane slices of the packed parameter buffer.
        w1v = p_ref[0:H, :]                                        # (H, 1)
        b1v = p_ref[H:2 * H, :]                                    # (H, 1)
        w2v = p_ref[2 * H:3 * H, :]                                # (H, 1)
        b2v = p_ref[3 * H:3 * H + 1, :]                            # (1, 1)
        # Layer 1: h = relu(W1 @ x + b1); K == 1 -> VPU outer product.
        h = jnp.maximum(w1v * xv + b1v, 0.0)                       # (H, B)
        # Layer 2: y = W2 @ h + b2; N == 1 -> VPU multiply + XLU sublane sum.
        y = jnp.sum(w2v * h, axis=0, keepdims=True) + b2v          # (1, B)
        o_ref[...] = y.astype(o_ref.dtype)

    out_t = pl.pallas_call(
        kernel,
        out_shape=jax.ShapeDtypeStruct((1, B), jnp.float32),
        grid_spec=pltpu.PrefetchScalarGridSpec(
            num_scalar_prefetch=0,
            grid=(1,),                                   # single step: whole batch
            in_specs=[
                pl.BlockSpec((1, B), lambda i: (0, 0)),       # x, lane-dense
                pl.BlockSpec((4 * H, 1), lambda i: (0, 0)),   # packed params
            ],
            out_specs=pl.BlockSpec((1, B), lambda i: (0, 0)),
        ),
        compiler_params=pltpu.CompilerParams(
            dimension_semantics=("arbitrary",),
        ),
    )(x_t, params)

    return out_t.T                                                 # (B, 1)


# Jitted entry point: fuses relayouts + pallas_call + output transpose.
mlp_forward = jax.jit(_mlp_forward)


def init_params(key, in_fea, n_hidden, out_fea):
    """Deterministic init mimicking nn.Linear's U(-1/sqrt(fan_in), 1/sqrt(fan_in)).

    Weights are kept in PyTorch layout: (out_features, in_features)."""
    k1, k2, k3, k4 = jax.random.split(key, 4)
    bound1 = 1.0 / jnp.sqrt(jnp.float32(in_fea))
    bound2 = 1.0 / jnp.sqrt(jnp.float32(n_hidden))
    w1 = jax.random.uniform(k1, (n_hidden, in_fea), jnp.float32, -bound1, bound1)
    b1 = jax.random.uniform(k2, (n_hidden,), jnp.float32, -bound1, bound1)
    w2 = jax.random.uniform(k3, (out_fea, n_hidden), jnp.float32, -bound2, bound2)
    b2 = jax.random.uniform(k4, (out_fea,), jnp.float32, -bound2, bound2)
    return w1, b1, w2, b2


if __name__ == "__main__":
    in_fea, n_hidden, out_fea = 1, 32, 1
    batch = 256

    key = jax.random.PRNGKey(0)
    w1, b1, w2, b2 = init_params(key, in_fea, n_hidden, out_fea)

    # x = torch.unsqueeze(torch.linspace(-2, 2, 256), 1)  -> shape (256, 1)
    x = jnp.linspace(-2.0, 2.0, batch, dtype=jnp.float32).reshape(batch, in_fea)

    out = mlp_forward(x, w1, b1, w2, b2)
    out = jax.block_until_ready(out)

    # Reference check in plain JAX (PyTorch nn.Linear convention: x @ W.T + b).
    ref = jnp.maximum(x @ w1.T + b1, 0.0) @ w2.T + b2
    assert out.shape == (batch, out_fea)
    assert jnp.allclose(out, ref, atol=1e-5, rtol=1e-5)

    print("KERNEL_OK")
</pallas_src>

<mosaic_0001>
module attributes {stable_mosaic.version = 11 : i64} {
  func.func @kernel(%arg0: i32, %arg1: memref<1x256xf32, #tpu.memory_space<vmem>>, %arg2: memref<128x1xf32, #tpu.memory_space<vmem>>, %arg3: memref<1x256xf32, #tpu.memory_space<vmem>>) attributes {dimension_semantics = [#tpu.dimension_semantics<arbitrary>], iteration_bounds = array<i64: 1>, scalar_prefetch = 0 : i64, scratch_operands = 0 : i64, tpu.core_type = #tpu.core_type<tc>, window_params = [{pipeline_mode = #tpu.pipeline_mode<synchronous>, transform_indices = @transform_0, window_bounds = array<i64: 1, 256>}, {pipeline_mode = #tpu.pipeline_mode<synchronous>, transform_indices = @transform_1, window_bounds = array<i64: 128, 1>}, {pipeline_mode = #tpu.pipeline_mode<synchronous>, transform_indices = @transform_2, window_bounds = array<i64: 1, 256>}]} {
    %c0 = arith.constant 0 : index
    %c0_0 = arith.constant 0 : index
    %0 = vector.load %arg1[%c0, %c0_0] : memref<1x256xf32, #tpu.memory_space<vmem>>, vector<1x256xf32>
    %c0_1 = arith.constant 0 : index
    %c0_2 = arith.constant 0 : index
    %1 = vector.load %arg2[%c0_1, %c0_2] : memref<128x1xf32, #tpu.memory_space<vmem>>, vector<32x1xf32>
    %c32 = arith.constant 32 : index
    %c0_3 = arith.constant 0 : index
    %2 = vector.load %arg2[%c32, %c0_3] : memref<128x1xf32, #tpu.memory_space<vmem>>, vector<32x1xf32>
    %c64 = arith.constant 64 : index
    %c0_4 = arith.constant 0 : index
    %3 = vector.load %arg2[%c64, %c0_4] : memref<128x1xf32, #tpu.memory_space<vmem>>, vector<32x1xf32>
    %c96 = arith.constant 96 : index
    %c0_5 = arith.constant 0 : index
    %4 = vector.load %arg2[%c96, %c0_5] : memref<128x1xf32, #tpu.memory_space<vmem>>, vector<1x1xf32>
    %5 = vector.broadcast %1 : vector<32x1xf32> to vector<32x256xf32>
    %6 = vector.broadcast %0 : vector<1x256xf32> to vector<32x256xf32>
    %7 = arith.mulf %5, %6 : vector<32x256xf32>
    %8 = vector.broadcast %2 : vector<32x1xf32> to vector<32x256xf32>
    %9 = arith.addf %7, %8 : vector<32x256xf32>
    %cst = arith.constant 0.000000e+00 : f32
    %10 = vector.broadcast %cst : f32 to vector<32x256xf32>
    %11 = arith.maximumf %9, %10 : vector<32x256xf32>
    %12 = vector.broadcast %3 : vector<32x1xf32> to vector<32x256xf32>
    %13 = arith.mulf %12, %11 : vector<32x256xf32>
    %cst_6 = arith.constant dense<0.000000e+00> : vector<256xf32>
    %14 = vector.multi_reduction <add>, %13, %cst_6 [0] : vector<32x256xf32> to vector<256xf32>
    %15 = vector.shape_cast %14 : vector<256xf32> to vector<1x256xf32>
    %16 = vector.broadcast %4 : vector<1x1xf32> to vector<1x256xf32>
    %17 = arith.addf %15, %16 : vector<1x256xf32>
    %c0_7 = arith.constant 0 : index
    %c0_8 = arith.constant 0 : index
    %18 = vector.load %arg3[%c0_7, %c0_8] : memref<1x256xf32, #tpu.memory_space<vmem>>, vector<1x256xf32>
    tpu.vector_store %arg3[%c0_7, %c0_8], %17 {strides = array<i32>} : memref<1x256xf32, #tpu.memory_space<vmem>>, vector<1x256xf32>,
    return
  }
  func.func @transform_0(%arg0: i32) -> (i32, i32) {
    %c0_i32 = arith.constant 0 : i32
    %c0_i32_0 = arith.constant 0 : i32
    %c0_i32_1 = arith.constant 0 : i32
    return %c0_i32, %c0_i32_0 : i32, i32
  }
  func.func @transform_1(%arg0: i32) -> (i32, i32) {
    %c0_i32 = arith.constant 0 : i32
    %c0_i32_0 = arith.constant 0 : i32
    %c0_i32_1 = arith.constant 0 : i32
    return %c0_i32, %c0_i32_0 : i32, i32
  }
  func.func @transform_2(%arg0: i32) -> (i32, i32) {
    %c0_i32 = arith.constant 0 : i32
    %c0_i32_0 = arith.constant 0 : i32
    %c0_i32_1 = arith.constant 0 : i32
    return %c0_i32, %c0_i32_0 : i32, i32
  }
}

</mosaic_0001>

<llo_original>
// kernel: _mlp_forward.1
$region0: #{_mlp_forward.1}
  #allocation0 [shape = 'u32[]', space=smem, size = 0x4, offset = 0x4, fixed_abs, tag = 'smem constant byte address 0x4 - core index']
  #allocation1 [shape = 'u32[144,128]{1,0:T(1,128)}', space=vmem, size = 0x12000, scoped, tag = 'internal scratch']
  %s0 = inlined_call_operand.vmem [shape: f32[1,256], index: 0, kind: input, shape index: {}]
  %s1 = inlined_call_operand.vmem [shape: f32[128,1], index: 1, kind: input, shape index: {}]
  %s2 = inlined_call_operand.hbm [shape: f32[1,256], index: 2, kind: output, shape index: {}]
  %s3 = sld [smem:[#allocation0]]
  $region18: #{_mlp_forward.1} parent=0
    _
  %s5 = ssub.s32 1, %s3
  %s6 = scalar_select 0, %s5, %s3
  $region1: #{_mlp_forward.1} parent=0
    #allocation2 [shape = 'u8[1024]{0}', space=vmem, size = 0x400, scoped, tag = 'output window, operand 0, single buffered']
    #allocation3 [shape = 's32[1]{0}', space=sflag, size = 0x4, scoped, tag = 'scoped memory for _mlp_forward.1']
    %7 = vsyncpa [#allocation3], 0
    // Predicated region
    $region2: #{_mlp_forward.1} parent=1 // pred_check
      _
    $region3: #{_mlp_forward.1} parent=1 // pred_check_branch
      %9 = sbr.rel (0) target = $region5
    $region4: #{_mlp_forward.1} parent=1 // pred_region
      _
    $region5: #{_mlp_forward.1} parent=1 // pred_fallthru
      _
    // Predicated region
    $region6: #{_mlp_forward.1} parent=1 // pred_check
      _
    $region7: #{_mlp_forward.1} parent=1 // pred_check_branch
      %11 = sbr.rel (0) target = $region9
    $region8: #{_mlp_forward.1} parent=1 // pred_region
      _
    $region9: #{_mlp_forward.1} parent=1 // pred_fallthru
      _
    %v12 = vld [vmem:[%s0] sm:$0x3]
    %v13 = vld [vmem:[%s1] sm:$0xff]
    %v14 = vld [vmem:[%s1 + $0x8] sm:$0xff]
    %v15 = vld [vmem:[%s1 + $0x10] sm:$0xff]
    %v16 = vld [vmem:[%s1 + $0x18] sm:$0xff]
    %v17 = vld [vmem:[%s1 + $0x20] sm:$0xff]
    %v18 = vld [vmem:[%s1 + $0x28] sm:$0xff]
    %v19 = vld [vmem:[%s1 + $0x30] sm:$0xff]
    %v20 = vld [vmem:[%s1 + $0x38] sm:$0xff]
    %v21 = vld [vmem:[%s1 + $0x40] sm:$0xff]
    %v22 = vld [vmem:[%s1 + $0x48] sm:$0xff]
    %v23 = vld [vmem:[%s1 + $0x50] sm:$0xff]
    %v24 = vld [vmem:[%s1 + $0x58] sm:$0xff]
    %v25 = vld [vmem:[%s1 + $0x60] sm:$0x1]
    %27 = vset.pattern.permute.xlu0 0
    %28 = vperm.xlu0 %27, %v13
    %v29 = vpop.permute.xlu0 %28
    %32 = vset.pattern.permute.xlu0 0
    %33 = vperm.xlu0 %32, %v14
    %v34 = vpop.permute.xlu0 %33
    %37 = vset.pattern.permute.xlu0 0
    %38 = vperm.xlu0 %37, %v15
    %v39 = vpop.permute.xlu0 %38
    %42 = vset.pattern.permute.xlu0 0
    %43 = vperm.xlu0 %42, %v16
    %v44 = vpop.permute.xlu0 %43
    %v47 = vlaneseq
    %v48 = vshrl.u32 %v47, 7
    %v49 = vsub.s32 0, %v48
    %v50 = vrot.slane %v12, %v49
    %v51 = vlaneseq
    %v52 = vshrl.u32 %v51, 7
    %v53 = vsub.s32 1, %v52
    %v54 = vrot.slane %v12, %v53
    %v57 = vmul.f32 %v29, %v50
    %v58 = vmul.f32 %v29, %v54
    %v59 = vmul.f32 %v34, %v50
    %v60 = vmul.f32 %v34, %v54
    %v61 = vmul.f32 %v39, %v50
    %v62 = vmul.f32 %v39, %v54
    %v63 = vmul.f32 %v44, %v50
    %v64 = vmul.f32 %v44, %v54
    %66 = vset.pattern.permute.xlu0 0
    %67 = vperm.xlu0 %66, %v17
    %v68 = vpop.permute.xlu0 %67
    %71 = vset.pattern.permute.xlu0 0
    %72 = vperm.xlu0 %71, %v18
    %v73 = vpop.permute.xlu0 %72
    %76 = vset.pattern.permute.xlu0 0
    %77 = vperm.xlu0 %76, %v19
    %v78 = vpop.permute.xlu0 %77
    %81 = vset.pattern.permute.xlu0 0
    %82 = vperm.xlu0 %81, %v20
    %v83 = vpop.permute.xlu0 %82
    %v85 = vadd.f32 %v57, %v68
    %v86 = vadd.f32 %v58, %v68
    %v87 = vadd.f32 %v59, %v73
    %v88 = vadd.f32 %v60, %v73
    %v89 = vadd.f32 %v61, %v78
    %v90 = vadd.f32 %v62, %v78
    %v91 = vadd.f32 %v63, %v83
    %v92 = vadd.f32 %v64, %v83
    %v93 = vmax.f32 %v85, 0.0
    %v94 = vmax.f32 %v86, 0.0
    %v95 = vmax.f32 %v87, 0.0
    %v96 = vmax.f32 %v88, 0.0
    %v97 = vmax.f32 %v89, 0.0
    %v98 = vmax.f32 %v90, 0.0
    %v99 = vmax.f32 %v91, 0.0
    %v100 = vmax.f32 %v92, 0.0
    %102 = vset.pattern.permute.xlu0 0
    %103 = vperm.xlu0 %102, %v21
    %v104 = vpop.permute.xlu0 %103
    %107 = vset.pattern.permute.xlu0 0
    %108 = vperm.xlu0 %107, %v22
    %v109 = vpop.permute.xlu0 %108
    %112 = vset.pattern.permute.xlu0 0
    %113 = vperm.xlu0 %112, %v23
    %v114 = vpop.permute.xlu0 %113
    %117 = vset.pattern.permute.xlu0 0
    %118 = vperm.xlu0 %117, %v24
    %v119 = vpop.permute.xlu0 %118
    %v121 = vmul.f32 %v104, %v93
    %v122 = vmul.f32 %v104, %v94
    %v123 = vmul.f32 %v109, %v95
    %v124 = vmul.f32 %v109, %v96
    %v125 = vmul.f32 %v114, %v97
    %v126 = vmul.f32 %v114, %v98
    %v127 = vmul.f32 %v119, %v99
    %v128 = vmul.f32 %v119, %v100
    %v129 = vadd.f32 %v121, %v123
    %v130 = vadd.f32 %v129, %v125
    %v131 = vadd.f32 %v130, %v127
    %v132 = vrot.slane %v131, 4
    %v133 = vadd.f32 %v131, %v132
    %v134 = vrot.slane %v133, 2
    %v135 = vadd.f32 %v133, %v134
    %v136 = vrot.slane %v135, 1
    %v137 = vadd.f32 %v135, %v136
    %v138 = vadd.f32 %v122, %v124
    %v139 = vadd.f32 %v138, %v126
    %v140 = vadd.f32 %v139, %v128
    %v141 = vrot.slane %v140, 4
    %v142 = vadd.f32 %v140, %v141
    %v143 = vrot.slane %v142, 2
    %v144 = vadd.f32 %v142, %v143
    %v145 = vrot.slane %v144, 1
    %v146 = vadd.f32 %v144, %v145
    %148 = vset.pattern.permute.xlu0 0
    %149 = vperm.xlu0 %148, %v25
    %v150 = vpop.permute.xlu0 %149
    %v152 = vadd.f32 %v137, %v150
    %v153 = vadd.f32 %v146, %v150
    %v156 = vcombine.low %v152, %v153
    %v158 = vunpack.c.l.s4 1966171168
    %v159 = vunpack.c.0.s8 %v158
    %v160 = vlaneseq
    %v161 = vshrl.u32 %v160, 7
    %v162 = vsub.s32 %v159, %v161
    %v163 = vrot.slane %v156, %v162
    %v165 = vunpack.c.l.s4 1966171168
    %v166 = vunpack.c.0.s8 %v165
    %v167 = vlaneseq
    %v168 = vshrl.u32 %v167, 7
    %v169 = vsub.s32 %v166, %v168
    %v170 = vrot.slane %v163, %v169
    %v172 = vlaneseq
    %vm173 = vcmp.ge.s32.totalorder %v172, 0
    %vm174 = vcmp.lt.s32.totalorder %v172, 256
    %vm175 = vmand %vm173, %vm174
    %176 = vst.msk [vmem:[#allocation2] sm:$0x3] %vm175, %v170
    // Predicated region
    $region10: #{_mlp_forward.1} parent=1 // pred_check
      _
    $region11: #{_mlp_forward.1} parent=1 // pred_check_branch
      %178 = sbr.rel (0) target = $region13
    $region12: #{_mlp_forward.1} parent=1 // pred_region
      %s180 = ssub.s32 32, 32
      %181 = vsyncadd [#allocation3], %s180
      %s183 = sshll.u32 [#allocation2], 4
      %s184 = int_to_ptr.vmem [resolvable:$true] %s183
      %186 = dma.vmem_to_hbm [thread:$0]  %s184, 32, %s2, [#allocation3]
    $region13: #{_mlp_forward.1} parent=1 // pred_fallthru
      _
    // Predicated region
    $region14: #{_mlp_forward.1} parent=1 // pred_check
      _
    $region15: #{_mlp_forward.1} parent=1 // pred_check_branch
      %188 = sbr.rel (0) target = $region17
    $region16: #{_mlp_forward.1} parent=1 // pred_region
      %189 = dma.done [#allocation3], 32
    $region17: #{_mlp_forward.1} parent=1 // pred_fallthru
      _
    %190 = vsyncpa [#allocation3], 1

</llo_original>
